<compile_context>
chip_gen: v6e
topology: v6e:2x2x1
jax: 0.10.0
libtpu: 0.0.40
codegen_flags: <defaults>
</compile_context>

<pallas_src>
import jax
import jax.numpy as jnp
from jax.experimental import pallas as pl
from jax.experimental.pallas import tpu as pltpu

INPUT_SIZE = 32
NUM_HEADS = 2
HEAD_DIM = INPUT_SIZE // (2 * NUM_HEADS)   # 8
QKV_DIM = HEAD_DIM * NUM_HEADS             # 16


def _attention_block_kernel(x_ref, wqkv_ref, bqkv_ref, wo_ref, bo_ref, o_ref):
    tb, s, c = x_ref.shape                      # (TB, S, 32) block
    x = x_ref[...]                              # (TB, S, 32) fp32
    xf = x.reshape(tb * s, c)                   # (TB*S, 32)  (sublane merge, free)

    # Fused QKV projection: one (TB*S,32)@(32,48) MXU pass.
    # The 1/sqrt(d_k) scale is already folded into the Q columns of wqkv/bqkv.
    qkv = jnp.dot(xf, wqkv_ref[...],
                  preferred_element_type=jnp.float32) + bqkv_ref[...]   # (TB*S, 48)

    q = qkv[:, 0 * QKV_DIM:1 * QKV_DIM].reshape(tb, s, QKV_DIM)          # (TB,S,16)
    k = qkv[:, 1 * QKV_DIM:2 * QKV_DIM].reshape(tb, s, QKV_DIM)
    v = qkv[:, 2 * QKV_DIM:3 * QKV_DIM].reshape(tb, s, QKV_DIM)

    attn_out = None
    for h in range(NUM_HEADS):                  # unrolled, 2 heads
        lo = h * HEAD_DIM
        hi = lo + HEAD_DIM
        qh = q[:, :, lo:hi]                     # (TB, S, 8)
        kh = k[:, :, lo:hi]
        vh = v[:, :, lo:hi]

        # scores = (Q * scale) @ K^T  (scale pre-folded into Q)
        scores = jnp.einsum('bqd,bkd->bqk', qh, kh,
                            preferred_element_type=jnp.float32)          # (TB,S,S)

        # numerically-stable softmax; denominator via EUP approx reciprocal
        m = jnp.max(scores, axis=-1, keepdims=True)
        e = jnp.exp(scores - m)
        p = e * pl.reciprocal(jnp.sum(e, axis=-1, keepdims=True), approx=True)

        # attn dropout (p=0.5) -> identity in eval mode
        ctx = jnp.einsum('bqk,bkd->bqd', p, vh,
                         preferred_element_type=jnp.float32)             # (TB,S,8)

        # project this head's context through its rows of W_O^T and accumulate
        # (avoids the per-head concatenate entirely).
        proj = jnp.dot(ctx.reshape(tb * s, HEAD_DIM), wo_ref[lo:hi, :],
                       preferred_element_type=jnp.float32)               # (TB*S,32)
        attn_out = proj if attn_out is None else attn_out + proj

    attn_out = attn_out + bo_ref[...]           # output bias

    # outer dropout (p=0.2) -> identity in eval mode; residual add with x
    o_ref[...] = attn_out.reshape(tb, s, INPUT_SIZE) + x


def _pick_block_b(B, S):
    """Largest TB that (a) keeps blocks a few MiB and (b) leaves >=2 grid steps."""
    per_batch_bytes = S * INPUT_SIZE * 4
    tb = min(B, max(1, (4 * 1024 * 1024) // per_batch_bytes))   # ~4 MiB block cap
    if B > 1:
        tb = min(tb, pl.cdiv(B, 2))   # >=2 steps: v7x megacore + pipelining
    return max(1, tb)


def attention_block_forward(x, fused_params):
    """x: (S, 32, B) float32 -> (S, 32, B) float32."""
    S, C, B = x.shape
    assert C == INPUT_SIZE

    xb = jnp.transpose(x, (2, 0, 1))            # (B, S, 32)
    wqkv, bqkv, wo, bo = fused_params

    TB = _pick_block_b(B, S)
    grid = (pl.cdiv(B, TB),)

    out = pl.pallas_call(
        _attention_block_kernel,
        out_shape=jax.ShapeDtypeStruct((B, S, INPUT_SIZE), jnp.float32),
        grid=grid,
        in_specs=[
            pl.BlockSpec((TB, S, INPUT_SIZE), lambda b: (b, 0, 0)),       # x block
            pl.BlockSpec((INPUT_SIZE, 3 * QKV_DIM), lambda b: (0, 0)),    # W_QKV^T (Q pre-scaled)
            pl.BlockSpec((1, 3 * QKV_DIM), lambda b: (0, 0)),             # b_QKV (Q pre-scaled)
            pl.BlockSpec((QKV_DIM, INPUT_SIZE), lambda b: (0, 0)),        # W_O^T
            pl.BlockSpec((1, INPUT_SIZE), lambda b: (0, 0)),              # b_O
        ],
        out_specs=pl.BlockSpec((TB, S, INPUT_SIZE), lambda b: (b, 0, 0)),
        compiler_params=pltpu.CompilerParams(
            dimension_semantics=("parallel",)),
    )(xb, wqkv, bqkv, wo, bo)

    return jnp.transpose(out, (1, 2, 0))        # (S, 32, B)


def init_raw_params(key):
    """Per-projection params matching the PyTorch module's shapes.

    Weights ~ N(0, d_k^{-1/2}) as in __init__; biases small deterministic
    values.  Weights are stored pre-transposed (in, out): y = x @ W^T + b.
    """
    std = HEAD_DIM ** (-0.5)
    ks = jax.random.split(key, 8)
    wq = jax.random.normal(ks[0], (INPUT_SIZE, QKV_DIM), jnp.float32) * std
    wk = jax.random.normal(ks[1], (INPUT_SIZE, QKV_DIM), jnp.float32) * std
    wv = jax.random.normal(ks[2], (INPUT_SIZE, QKV_DIM), jnp.float32) * std
    wo = jax.random.normal(ks[3], (QKV_DIM, INPUT_SIZE), jnp.float32) * std
    bq = jax.random.normal(ks[4], (1, QKV_DIM), jnp.float32) * 0.01
    bk = jax.random.normal(ks[5], (1, QKV_DIM), jnp.float32) * 0.01
    bv = jax.random.normal(ks[6], (1, QKV_DIM), jnp.float32) * 0.01
    bo = jax.random.normal(ks[7], (1, INPUT_SIZE), jnp.float32) * 0.01
    return (wq, bq, wk, bk, wv, bv, wo, bo)


def fuse_params(raw):
    """One-time parameter transform: fuse QKV and fold 1/sqrt(d_k) into Q."""
    wq, bq, wk, bk, wv, bv, wo, bo = raw
    scale = jnp.float32(HEAD_DIM ** -0.5)
    wqkv = jnp.concatenate([wq * scale, wk, wv], axis=1)   # (32, 48)
    bqkv = jnp.concatenate([bq * scale, bk, bv], axis=1)   # (1, 48)
    return (wqkv, bqkv, wo, bo)


def reference_forward(x, raw):
    """Pure-JAX reference mirroring the PyTorch forward (dropout = identity)."""
    wq, bq, wk, bk, wv, bv, wo, bo = raw
    S, C, B = x.shape
    xb = jnp.transpose(x, (2, 0, 1))                        # (B, S, 32)
    q = (xb @ wq + bq).reshape(B, S, NUM_HEADS, HEAD_DIM)
    k = (xb @ wk + bk).reshape(B, S, NUM_HEADS, HEAD_DIM)
    v = (xb @ wv + bv).reshape(B, S, NUM_HEADS, HEAD_DIM)
    s = jnp.einsum('bqhd,bkhd->bhqk', q, k) / (HEAD_DIM ** 0.5)
    p = jax.nn.softmax(s, axis=-1)
    ctx = jnp.einsum('bhqk,bkhd->bqhd', p, v).reshape(B, S, QKV_DIM)
    out = ctx @ wo + bo + xb
    return jnp.transpose(out, (1, 2, 0))                    # (S, 32, B)


if __name__ == "__main__":
    key = jax.random.PRNGKey(0)
    k_x, k_p = jax.random.split(key)

    S, B = 8, 2                                 # seq_len=8, batch=2
    x = jax.random.normal(k_x, (S, INPUT_SIZE, B), jnp.float32)   # (S, 32, B)
    raw = init_raw_params(k_p)
    fused = fuse_params(raw)

    out = attention_block_forward(x, fused)
    jax.block_until_ready(out)
    assert out.shape == (S, INPUT_SIZE, B)

    # correctness check vs. pure-JAX reference (loose tol: approx reciprocal)
    ref = reference_forward(x, raw)
    assert jnp.allclose(out, ref, atol=2e-2, rtol=2e-2), float(
        jnp.max(jnp.abs(out - ref)))

    print("KERNEL_OK")
</pallas_src>

<mosaic_0001>
module attributes {stable_mosaic.version = 11 : i64} {
  func.func @_attention_block_kernel(%arg0: i32, %arg1: memref<1x8x32xf32, #tpu.memory_space<vmem>>, %arg2: memref<32x48xf32, #tpu.memory_space<vmem>>, %arg3: memref<1x48xf32, #tpu.memory_space<vmem>>, %arg4: memref<16x32xf32, #tpu.memory_space<vmem>>, %arg5: memref<1x32xf32, #tpu.memory_space<vmem>>, %arg6: memref<1x8x32xf32, #tpu.memory_space<vmem>>) attributes {dimension_semantics = [#tpu.dimension_semantics<parallel>], iteration_bounds = array<i64: 2>, scalar_prefetch = 0 : i64, scratch_operands = 0 : i64, tpu.core_type = #tpu.core_type<tc>, window_params = [{transform_indices = @transform_0, window_bounds = array<i64: 1, 8, 32>}, {pipeline_mode = #tpu.pipeline_mode<synchronous>, transform_indices = @transform_1, window_bounds = array<i64: 32, 48>}, {pipeline_mode = #tpu.pipeline_mode<synchronous>, transform_indices = @transform_2, window_bounds = array<i64: 1, 48>}, {pipeline_mode = #tpu.pipeline_mode<synchronous>, transform_indices = @transform_3, window_bounds = array<i64: 16, 32>}, {pipeline_mode = #tpu.pipeline_mode<synchronous>, transform_indices = @transform_4, window_bounds = array<i64: 1, 32>}, {transform_indices = @transform_5, window_bounds = array<i64: 1, 8, 32>}]} {
    %c0 = arith.constant 0 : index
    %c0_0 = arith.constant 0 : index
    %c0_1 = arith.constant 0 : index
    %0 = vector.load %arg1[%c0, %c0_0, %c0_1] : memref<1x8x32xf32, #tpu.memory_space<vmem>>, vector<1x8x32xf32>
    %1 = vector.shape_cast %0 : vector<1x8x32xf32> to vector<8x32xf32>
    %c0_2 = arith.constant 0 : index
    %c0_3 = arith.constant 0 : index
    %2 = vector.load %arg2[%c0_2, %c0_3] : memref<32x48xf32, #tpu.memory_space<vmem>>, vector<32x48xf32>
    %cst = arith.constant dense<0.000000e+00> : vector<8x48xf32>
    %3 = tpu.matmul %1, %2, %cst {dimension_numbers = #tpu.dot_dimension_numbers<[1], [0], [0], [1], [0, 0, 1, 1], [], []>} : vector<8x32xf32>, vector<32x48xf32>, vector<8x48xf32> -> vector<8x48xf32>
    %c0_4 = arith.constant 0 : index
    %c0_5 = arith.constant 0 : index
    %4 = vector.load %arg3[%c0_4, %c0_5] : memref<1x48xf32, #tpu.memory_space<vmem>>, vector<1x48xf32>
    %5 = vector.broadcast %4 : vector<1x48xf32> to vector<8x48xf32>
    %6 = arith.addf %3, %5 : vector<8x48xf32>
    %7 = vector.extract_strided_slice %6 {offsets = [0, 0], sizes = [8, 16], strides = [1, 1]} : vector<8x48xf32> to vector<8x16xf32>
    %8 = vector.shape_cast %7 : vector<8x16xf32> to vector<1x8x16xf32>
    %9 = vector.extract_strided_slice %6 {offsets = [0, 16], sizes = [8, 16], strides = [1, 1]} : vector<8x48xf32> to vector<8x16xf32>
    %10 = vector.shape_cast %9 : vector<8x16xf32> to vector<1x8x16xf32>
    %11 = vector.extract_strided_slice %6 {offsets = [0, 32], sizes = [8, 16], strides = [1, 1]} : vector<8x48xf32> to vector<8x16xf32>
    %12 = vector.shape_cast %11 : vector<8x16xf32> to vector<1x8x16xf32>
    %13 = vector.extract_strided_slice %8 {offsets = [0, 0, 0], sizes = [1, 8, 8], strides = [1, 1, 1]} : vector<1x8x16xf32> to vector<1x8x8xf32>
    %14 = vector.extract_strided_slice %10 {offsets = [0, 0, 0], sizes = [1, 8, 8], strides = [1, 1, 1]} : vector<1x8x16xf32> to vector<1x8x8xf32>
    %15 = vector.extract_strided_slice %12 {offsets = [0, 0, 0], sizes = [1, 8, 8], strides = [1, 1, 1]} : vector<1x8x16xf32> to vector<1x8x8xf32>
    "tpu.trace_start"() <{level = 10 : i32, message = "bqd,bkd->bqk"}> : () -> ()
    %cst_6 = arith.constant dense<0.000000e+00> : vector<1x8x8xf32>
    %16 = tpu.matmul %13, %14, %cst_6 {dimension_numbers = #tpu.dot_dimension_numbers<[2], [2], [1], [1], [0, 0, 0, 1, 1, 1], [0], [0]>} : vector<1x8x8xf32>, vector<1x8x8xf32>, vector<1x8x8xf32> -> vector<1x8x8xf32>
    "tpu.trace_stop"() : () -> ()
    %cst_7 = arith.constant dense<0xFF800000> : vector<1x8xf32>
    %17 = vector.multi_reduction <maximumf>, %16, %cst_7 [2] : vector<1x8x8xf32> to vector<1x8xf32>
    %18 = vector.shape_cast %17 : vector<1x8xf32> to vector<1x8x1xf32>
    %19 = vector.broadcast %18 : vector<1x8x1xf32> to vector<1x8x8xf32>
    %20 = arith.subf %16, %19 : vector<1x8x8xf32>
    %21 = math.exp %20 : vector<1x8x8xf32>
    %cst_8 = arith.constant dense<0.000000e+00> : vector<1x8xf32>
    %22 = vector.multi_reduction <add>, %21, %cst_8 [2] : vector<1x8x8xf32> to vector<1x8xf32>
    %23 = vector.shape_cast %22 : vector<1x8xf32> to vector<1x8x1xf32>
    %24 = tpu.reciprocal %23 {approx = true} : vector<1x8x1xf32> -> vector<1x8x1xf32>
    %25 = vector.broadcast %24 : vector<1x8x1xf32> to vector<1x8x8xf32>
    %26 = arith.mulf %21, %25 : vector<1x8x8xf32>
    "tpu.trace_start"() <{level = 10 : i32, message = "bqk,bkd->bqd"}> : () -> ()
    %cst_9 = arith.constant dense<0.000000e+00> : vector<1x8x8xf32>
    %27 = tpu.matmul %26, %15, %cst_9 {dimension_numbers = #tpu.dot_dimension_numbers<[2], [1], [1], [2], [0, 0, 0, 1, 1, 2], [0], [0]>} : vector<1x8x8xf32>, vector<1x8x8xf32>, vector<1x8x8xf32> -> vector<1x8x8xf32>
    "tpu.trace_stop"() : () -> ()
    %28 = vector.shape_cast %27 : vector<1x8x8xf32> to vector<8x8xf32>
    %c0_10 = arith.constant 0 : index
    %c0_11 = arith.constant 0 : index
    %29 = vector.load %arg4[%c0_10, %c0_11] : memref<16x32xf32, #tpu.memory_space<vmem>>, vector<8x32xf32>
    %cst_12 = arith.constant dense<0.000000e+00> : vector<8x32xf32>
    %30 = tpu.matmul %28, %29, %cst_12 {dimension_numbers = #tpu.dot_dimension_numbers<[1], [0], [0], [1], [0, 0, 1, 1], [], []>} : vector<8x8xf32>, vector<8x32xf32>, vector<8x32xf32> -> vector<8x32xf32>
    %31 = vector.extract_strided_slice %8 {offsets = [0, 0, 8], sizes = [1, 8, 8], strides = [1, 1, 1]} : vector<1x8x16xf32> to vector<1x8x8xf32>
    %32 = vector.extract_strided_slice %10 {offsets = [0, 0, 8], sizes = [1, 8, 8], strides = [1, 1, 1]} : vector<1x8x16xf32> to vector<1x8x8xf32>
    %33 = vector.extract_strided_slice %12 {offsets = [0, 0, 8], sizes = [1, 8, 8], strides = [1, 1, 1]} : vector<1x8x16xf32> to vector<1x8x8xf32>
    "tpu.trace_start"() <{level = 10 : i32, message = "bqd,bkd->bqk"}> : () -> ()
    %cst_13 = arith.constant dense<0.000000e+00> : vector<1x8x8xf32>
    %34 = tpu.matmul %31, %32, %cst_13 {dimension_numbers = #tpu.dot_dimension_numbers<[2], [2], [1], [1], [0, 0, 0, 1, 1, 1], [0], [0]>} : vector<1x8x8xf32>, vector<1x8x8xf32>, vector<1x8x8xf32> -> vector<1x8x8xf32>
    "tpu.trace_stop"() : () -> ()
    %cst_14 = arith.constant dense<0xFF800000> : vector<1x8xf32>
    %35 = vector.multi_reduction <maximumf>, %34, %cst_14 [2] : vector<1x8x8xf32> to vector<1x8xf32>
    %36 = vector.shape_cast %35 : vector<1x8xf32> to vector<1x8x1xf32>
    %37 = vector.broadcast %36 : vector<1x8x1xf32> to vector<1x8x8xf32>
    %38 = arith.subf %34, %37 : vector<1x8x8xf32>
    %39 = math.exp %38 : vector<1x8x8xf32>
    %cst_15 = arith.constant dense<0.000000e+00> : vector<1x8xf32>
    %40 = vector.multi_reduction <add>, %39, %cst_15 [2] : vector<1x8x8xf32> to vector<1x8xf32>
    %41 = vector.shape_cast %40 : vector<1x8xf32> to vector<1x8x1xf32>
    %42 = tpu.reciprocal %41 {approx = true} : vector<1x8x1xf32> -> vector<1x8x1xf32>
    %43 = vector.broadcast %42 : vector<1x8x1xf32> to vector<1x8x8xf32>
    %44 = arith.mulf %39, %43 : vector<1x8x8xf32>
    "tpu.trace_start"() <{level = 10 : i32, message = "bqk,bkd->bqd"}> : () -> ()
    %cst_16 = arith.constant dense<0.000000e+00> : vector<1x8x8xf32>
    %45 = tpu.matmul %44, %33, %cst_16 {dimension_numbers = #tpu.dot_dimension_numbers<[2], [1], [1], [2], [0, 0, 0, 1, 1, 2], [0], [0]>} : vector<1x8x8xf32>, vector<1x8x8xf32>, vector<1x8x8xf32> -> vector<1x8x8xf32>
    "tpu.trace_stop"() : () -> ()
    %46 = vector.shape_cast %45 : vector<1x8x8xf32> to vector<8x8xf32>
    %c8 = arith.constant 8 : index
    %c0_17 = arith.constant 0 : index
    %47 = vector.load %arg4[%c8, %c0_17] : memref<16x32xf32, #tpu.memory_space<vmem>>, vector<8x32xf32>
    %cst_18 = arith.constant dense<0.000000e+00> : vector<8x32xf32>
    %48 = tpu.matmul %46, %47, %cst_18 {dimension_numbers = #tpu.dot_dimension_numbers<[1], [0], [0], [1], [0, 0, 1, 1], [], []>} : vector<8x8xf32>, vector<8x32xf32>, vector<8x32xf32> -> vector<8x32xf32>
    %49 = arith.addf %30, %48 : vector<8x32xf32>
    %c0_19 = arith.constant 0 : index
    %c0_20 = arith.constant 0 : index
    %50 = vector.load %arg5[%c0_19, %c0_20] : memref<1x32xf32, #tpu.memory_space<vmem>>, vector<1x32xf32>
    %51 = vector.broadcast %50 : vector<1x32xf32> to vector<8x32xf32>
    %52 = arith.addf %49, %51 : vector<8x32xf32>
    %53 = vector.shape_cast %52 : vector<8x32xf32> to vector<1x8x32xf32>
    %54 = arith.addf %53, %0 : vector<1x8x32xf32>
    %c0_21 = arith.constant 0 : index
    %c0_22 = arith.constant 0 : index
    %c0_23 = arith.constant 0 : index
    %55 = vector.load %arg6[%c0_21, %c0_22, %c0_23] : memref<1x8x32xf32, #tpu.memory_space<vmem>>, vector<1x8x32xf32>
    tpu.vector_store %arg6[%c0_21, %c0_22, %c0_23], %54 {strides = array<i32>} : memref<1x8x32xf32, #tpu.memory_space<vmem>>, vector<1x8x32xf32>,
    return
  }
  func.func @transform_0(%arg0: i32) -> (i32, i32, i32) {
    %c0_i32 = arith.constant 0 : i32
    %c0_i32_0 = arith.constant 0 : i32
    %c0_i32_1 = arith.constant 0 : i32
    return %arg0, %c0_i32, %c0_i32_0 : i32, i32, i32
  }
  func.func @transform_1(%arg0: i32) -> (i32, i32) {
    %c0_i32 = arith.constant 0 : i32
    %c0_i32_0 = arith.constant 0 : i32
    %c0_i32_1 = arith.constant 0 : i32
    return %c0_i32, %c0_i32_0 : i32, i32
  }
  func.func @transform_2(%arg0: i32) -> (i32, i32) {
    %c0_i32 = arith.constant 0 : i32
    %c0_i32_0 = arith.constant 0 : i32
    %c0_i32_1 = arith.constant 0 : i32
    return %c0_i32, %c0_i32_0 : i32, i32
  }
  func.func @transform_3(%arg0: i32) -> (i32, i32) {
    %c0_i32 = arith.constant 0 : i32
    %c0_i32_0 = arith.constant 0 : i32
    %c0_i32_1 = arith.constant 0 : i32
    return %c0_i32, %c0_i32_0 : i32, i32
  }
  func.func @transform_4(%arg0: i32) -> (i32, i32) {
    %c0_i32 = arith.constant 0 : i32
    %c0_i32_0 = arith.constant 0 : i32
    %c0_i32_1 = arith.constant 0 : i32
    return %c0_i32, %c0_i32_0 : i32, i32
  }
  func.func @transform_5(%arg0: i32) -> (i32, i32, i32) {
    %c0_i32 = arith.constant 0 : i32
    %c0_i32_0 = arith.constant 0 : i32
    %c0_i32_1 = arith.constant 0 : i32
    return %arg0, %c0_i32, %c0_i32_0 : i32, i32, i32
  }
}

</mosaic_0001>

<llo_original>
// kernel: tpu_custom_call.1
$region0: #{tpu_custom_call.1}
  #allocation0 [shape = 'u32[]', space=smem, size = 0x4, offset = 0x4, fixed_abs, tag = 'smem constant byte address 0x4 - core index']
  #allocation1 [shape = 'u32[144,128]{1,0:T(1,128)}', space=vmem, size = 0x12000, scoped, tag = 'internal scratch']
  %s0 = inlined_call_operand.hbm [shape: f32[2,8,32], index: 0, kind: input, shape index: {}]
  %s1 = inlined_call_operand.hbm [shape: f32[32,48], index: 1, kind: input, shape index: {}]
  %s2 = inlined_call_operand.vmem [shape: f32[1,48], index: 2, kind: input, shape index: {}]
  %s3 = inlined_call_operand.hbm [shape: f32[16,32], index: 3, kind: input, shape index: {}]
  %s4 = inlined_call_operand.vmem [shape: f32[1,32], index: 4, kind: input, shape index: {}]
  %s5 = inlined_call_operand.hbm [shape: f32[2,8,32], index: 5, kind: output, shape index: {}]
  %s6 = sld [smem:[#allocation0]]
  $region65: #{tpu_custom_call.1} parent=0
    _
  %s8 = ssub.s32 1, %s6
  %s9 = scalar_select 0, %s8, %s6
  $region1: #{tpu_custom_call.1} parent=0
    #allocation2 [shape = 'u8[8192]{0}', space=vmem, size = 0x2000, scoped, tag = 'input window, operand 0']
    #allocation3 [shape = 's32[2]{0}', space=sflag, size = 0x8, scoped, tag = 'scoped memory for tpu_custom_call.1']
    #allocation4 [shape = 's32[2]{0}', space=sflag, size = 0x8, scoped, tag = 'scoped memory for tpu_custom_call.1']
    #allocation5 [shape = 'u8[16384]{0}', space=vmem, size = 0x4000, scoped, tag = 'input window, operand 1, single buffered']
    #allocation6 [shape = 's32[1]{0}', space=sflag, size = 0x4, scoped, tag = 'scoped memory for tpu_custom_call.1']
    #allocation7 [shape = 'u8[8192]{0}', space=vmem, size = 0x2000, scoped, tag = 'input window, operand 3, single buffered']
    #allocation8 [shape = 'u8[8192]{0}', space=vmem, size = 0x2000, scoped, tag = 'output window, operand 0']
    %10 = vsyncpa [#allocation3], 0
    %s11 = scalar_lea.sflag [#allocation3], 1
    %12 = vsyncpa %s11, 0
    %13 = vsyncpa [#allocation6], 0
    %14 = vsyncpa [#allocation4], 0
    %s15 = scalar_lea.sflag [#allocation4], 1
    %16 = vsyncpa %s15, 0
    loop: start=0, step=1, limit=4
    $region2: #{tpu_custom_call.1} parent=1 // loop_pre_header
      _
    $region3: #{tpu_custom_call.1} parent=1 // loop_header
      %s18 = sphi 0, %s22
      %p19 = scmp.ge.s32.totalorder %s18, 4
      %s28 = sphi 0, %s30
      %s31 = sphi 0, %s28
      %s32 = sphi 0, %s31
      %s48 = sphi 0, %s32
      %s52 = sphi 0, %s52
      %s54 = sphi 0, %s52
      %s55 = sphi 0, %s54
      %s69 = sphi 0, %s55
      %s73 = sphi 0, %s73
      %s75 = sphi 0, %s73
      %s76 = sphi 0, %s75
      %s90 = sphi 0, %s76
      %s94 = sphi 0, %s94
      %s96 = sphi 0, %s94
      %s97 = sphi 0, %s96
      %s111 = sphi 0, %s97
      %s115 = sphi 0, %s115
      %s117 = sphi 0, %s115
      %s118 = sphi 0, %s117
      %s132 = sphi 0, %s118
      %s138 = sphi 0, %s140
      %s141 = sphi 0, %s138
      %s142 = sphi 0, %s141
      %s158 = sphi 0, %s142
    $region4: #{tpu_custom_call.1} parent=1 // loop_header_branch
      %21 = sbr.rel (%p19) target = $region8
    $region5: #{tpu_custom_call.1} parent=1 // loop_body
      %s23 = ssub.s32 %s18, 1
      %s24 = ssub.s32 %s18, 2
      %s25 = sadd.s32 %s18, 1
      %s26 = ssub.s32 %s18, %s25
      %p27 = scmp.eq.s32.totalorder %s26, 0
      %s29 = sadd.s32 %s28, 1
      %s30 = scalar_select %p27, %s28, %s29
      %p33 = pneg %p27
      %p34 = scmp.eq.s32.totalorder %s18, 1
      %p35 = por %p33, %p34
      %p36 = scmp.ne.s32.totalorder %s28, %s31
      %p37 = scmp.eq.s32.totalorder %s18, 0
      %p38 = por %p36, %p37
      %p39 = scmp.ne.s32.totalorder %s28, %s31
      %p40 = scmp.eq.s32.totalorder %s23, 1
      %p41 = por %p39, %p40
      %p42 = scmp.ne.s32.totalorder %s31, %s32
      %p43 = scmp.eq.s32.totalorder %s23, 0
      %p44 = por %p42, %p43
      %p45 = scmp.ne.s32.totalorder %s31, %s32
      %p46 = scmp.eq.s32.totalorder %s24, 1
      %p47 = por %p45, %p46
      %p49 = scmp.ne.s32.totalorder %s32, %s48
      %p50 = scmp.eq.s32.totalorder %s24, 0
      %p51 = por %p49, %p50
      %s53 = sadd.s32 %s52, 1
      %p56 = scmp.eq.s32.totalorder %s18, 1
      %p57 = scmp.ne.s32.totalorder %s52, %s54
      %p58 = scmp.eq.s32.totalorder %s18, 0
      %p59 = por %p57, %p58
      %p60 = scmp.ne.s32.totalorder %s52, %s54
      %p61 = scmp.eq.s32.totalorder %s23, 1
      %p62 = por %p60, %p61
      %p63 = scmp.ne.s32.totalorder %s54, %s55
      %p64 = scmp.eq.s32.totalorder %s23, 0
      %p65 = por %p63, %p64
      %p66 = scmp.ne.s32.totalorder %s54, %s55
      %p67 = scmp.eq.s32.totalorder %s24, 1
      %p68 = por %p66, %p67
      %p70 = scmp.ne.s32.totalorder %s55, %s69
      %p71 = scmp.eq.s32.totalorder %s24, 0
      %p72 = por %p70, %p71
      %s74 = sadd.s32 %s73, 1
      %p77 = scmp.eq.s32.totalorder %s18, 1
      %p78 = scmp.ne.s32.totalorder %s73, %s75
      %p79 = scmp.eq.s32.totalorder %s18, 0
      %p80 = por %p78, %p79
      %p81 = scmp.ne.s32.totalorder %s73, %s75
      %p82 = scmp.eq.s32.totalorder %s23, 1
      %p83 = por %p81, %p82
      %p84 = scmp.ne.s32.totalorder %s75, %s76
      %p85 = scmp.eq.s32.totalorder %s23, 0
      %p86 = por %p84, %p85
      %p87 = scmp.ne.s32.totalorder %s75, %s76
      %p88 = scmp.eq.s32.totalorder %s24, 1
      %p89 = por %p87, %p88
      %p91 = scmp.ne.s32.totalorder %s76, %s90
      %p92 = scmp.eq.s32.totalorder %s24, 0
      %p93 = por %p91, %p92
      %s95 = sadd.s32 %s94, 1
      %p98 = scmp.eq.s32.totalorder %s18, 1
      %p99 = scmp.ne.s32.totalorder %s94, %s96
      %p100 = scmp.eq.s32.totalorder %s18, 0
      %p101 = por %p99, %p100
      %p102 = scmp.ne.s32.totalorder %s94, %s96
      %p103 = scmp.eq.s32.totalorder %s23, 1
      %p104 = por %p102, %p103
      %p105 = scmp.ne.s32.totalorder %s96, %s97
      %p106 = scmp.eq.s32.totalorder %s23, 0
      %p107 = por %p105, %p106
      %p108 = scmp.ne.s32.totalorder %s96, %s97
      %p109 = scmp.eq.s32.totalorder %s24, 1
      %p110 = por %p108, %p109
      %p112 = scmp.ne.s32.totalorder %s97, %s111
      %p113 = scmp.eq.s32.totalorder %s24, 0
      %p114 = por %p112, %p113
      %s116 = sadd.s32 %s115, 1
      %p119 = scmp.eq.s32.totalorder %s18, 1
      %p120 = scmp.ne.s32.totalorder %s115, %s117
      %p121 = scmp.eq.s32.totalorder %s18, 0
      %p122 = por %p120, %p121
      %p123 = scmp.ne.s32.totalorder %s115, %s117
      %p124 = scmp.eq.s32.totalorder %s23, 1
      %p125 = por %p123, %p124
      %p126 = scmp.ne.s32.totalorder %s117, %s118
      %p127 = scmp.eq.s32.totalorder %s23, 0
      %p128 = por %p126, %p127
      %p129 = scmp.ne.s32.totalorder %s117, %s118
      %p130 = scmp.eq.s32.totalorder %s24, 1
      %p131 = por %p129, %p130
      %p133 = scmp.ne.s32.totalorder %s118, %s132
      %p134 = scmp.eq.s32.totalorder %s24, 0
      %p135 = por %p133, %p134
      %s136 = ssub.s32 %s18, %s25
      %p137 = scmp.eq.s32.totalorder %s136, 0
      %s139 = sadd.s32 %s138, 1
      %s140 = scalar_select %p137, %s138, %s139
      %p143 = pneg %p137
      %p144 = scmp.eq.s32.totalorder %s18, 1
      %p145 = por %p143, %p144
      %p146 = scmp.ne.s32.totalorder %s138, %s141
      %p147 = scmp.eq.s32.totalorder %s18, 0
      %p148 = por %p146, %p147
      %p149 = scmp.ne.s32.totalorder %s138, %s141
      %p150 = scmp.eq.s32.totalorder %s23, 1
      %p151 = por %p149, %p150
      %p152 = scmp.ne.s32.totalorder %s141, %s142
      %p153 = scmp.eq.s32.totalorder %s23, 0
      %p154 = por %p152, %p153
      %p155 = scmp.ne.s32.totalorder %s141, %s142
      %p156 = scmp.eq.s32.totalorder %s24, 1
      %p157 = por %p155, %p156
      %p159 = scmp.ne.s32.totalorder %s142, %s158
      %p160 = scmp.eq.s32.totalorder %s24, 0
      %p161 = por %p159, %p160
      %p162 = scmp.le.s32.totalorder 1, %s18
      %p163 = scmp.lt.s32.totalorder %s18, 3
      %p164 = pnand %p162, %p163
      %p165 = pneg %p164
      // Predicated region
      $region9: #{tpu_custom_call.1} parent=5 // pred_check
        _
      $region10: #{tpu_custom_call.1} parent=5 // pred_check_branch
        %167 = sbr.rel (%p164) target = $region12
      $region11: #{tpu_custom_call.1} parent=5 // pred_region
        %s168 = ssub.s32 %s18, 1
        // Predicated region
        $region13: #{tpu_custom_call.1} parent=11 // pred_check
          %p169 = pneg %p65
        $region14: #{tpu_custom_call.1} parent=11 // pred_check_branch
          %171 = sbr.rel (%p169) target = $region16
        $region15: #{tpu_custom_call.1} parent=11 // pred_region
          %s173 = ssub.s32 512, 512
          %174 = vsyncadd [#allocation6], %s173
          %s175 = sshll.u32 [#allocation5], 4
          %s176 = int_to_ptr.vmem [resolvable:$true] %s175
          %181 = dma.hbm_to_vmem [thread:$0]  %s1, 512, %s176, [#allocation6], 128, 128, 8
        $region16: #{tpu_custom_call.1} parent=11 // pred_fallthru
          _
        // Predicated region
        $region17: #{tpu_custom_call.1} parent=11 // pred_check
          %p182 = pneg %p86
        $region18: #{tpu_custom_call.1} parent=11 // pred_check_branch
          %184 = sbr.rel (%p182) target = $region20
        $region19: #{tpu_custom_call.1} parent=11 // pred_region
          _
        $region20: #{tpu_custom_call.1} parent=11 // pred_fallthru
          _
        // Predicated region
        $region21: #{tpu_custom_call.1} parent=11 // pred_check
          %p185 = pneg %p107
        $region22: #{tpu_custom_call.1} parent=11 // pred_check_branch
          %187 = sbr.rel (%p185) target = $region24
        $region23: #{tpu_custom_call.1} parent=11 // pred_region
          %s189 = ssub.s32 256, 256
          %190 = vsyncadd [#allocation6], %s189
          %s191 = sshll.u32 [#allocation7], 4
          %s192 = int_to_ptr.vmem [resolvable:$true] %s191
          %197 = dma.hbm_to_vmem [thread:$0]  %s3, 256, %s192, [#allocation6], 128, 128, 8
        $region24: #{tpu_custom_call.1} parent=11 // pred_fallthru
          _
        // Predicated region
        $region25: #{tpu_custom_call.1} parent=11 // pred_check
          %p198 = pneg %p128
        $region26: #{tpu_custom_call.1} parent=11 // pred_check_branch
          %200 = sbr.rel (%p198) target = $region28
        $region27: #{tpu_custom_call.1} parent=11 // pred_region
          _
        $region28: #{tpu_custom_call.1} parent=11 // pred_fallthru
          _
      $region12: #{tpu_custom_call.1} parent=5 // pred_fallthru
        _
      %p201 = scmp.lt.s32.totalorder %s18, 2
      // Predicated region
      $region29: #{tpu_custom_call.1} parent=5 // pred_check
        %p202 = pneg %p201
      $region30: #{tpu_custom_call.1} parent=5 // pred_check_branch
        %204 = sbr.rel (%p202) target = $region32
      $region31: #{tpu_custom_call.1} parent=5 // pred_region
        // Predicated region
        $region33: #{tpu_custom_call.1} parent=31 // pred_check
          %p205 = pneg %p38
        $region34: #{tpu_custom_call.1} parent=31 // pred_check_branch
          %207 = sbr.rel (%p205) target = $region36
        $region35: #{tpu_custom_call.1} parent=31 // pred_region
          %s208 = sand.u32 %s28, 1
          %s209 = scalar_lea.sflag [#allocation3], %s208
          %s210 = sand.u32 %s28, 1
          %s211 = smul.addr %s210, 8
          %s212 = scalar_lea.vmem [#allocation2], %s211
          %s214 = ssub.s32 128, 128
          %215 = vsyncadd %s209, %s214
          %s216 = smul.addr %s18, 128
          %s217 = scalar_lea.hbm %s0, %s216
          %s219 = sshll.u32 %s212, 4
          %s220 = int_to_ptr.vmem [resolvable:$true] %s219
          %222 = dma.hbm_to_vmem [thread:$0]  %s217, 128, %s220, %s209
        $region36: #{tpu_custom_call.1} parent=31 // pred_fallthru
          _
      $region32: #{tpu_custom_call.1} parent=5 // pred_fallthru
        _
      %p223 = scmp.le.s32.totalorder 1, %s18
      %p224 = scmp.lt.s32.totalorder %s18, 3
      %p225 = pnand %p223, %p224
      %p226 = pneg %p225
      // Predicated region
      $region37: #{tpu_custom_call.1} parent=5 // pred_check
        _
      $region38: #{tpu_custom_call.1} parent=5 // pred_check_branch
        %228 = sbr.rel (%p225) target = $region40
      $region39: #{tpu_custom_call.1} parent=5 // pred_region
        %s229 = ssub.s32 %s18, 1
        %s230 = sand.u32 %s31, 1
        %s231 = scalar_lea.sflag [#allocation3], %s230
        %s232 = sand.u32 %s31, 1
        %s233 = smul.addr %s232, 8
        %s234 = scalar_lea.vmem [#allocation2], %s233
        // Predicated region
        $region41: #{tpu_custom_call.1} parent=39 // pred_check
          %p235 = pneg %p44
        $region42: #{tpu_custom_call.1} parent=39 // pred_check_branch
          %237 = sbr.rel (%p235) target = $region44
        $region43: #{tpu_custom_call.1} parent=39 // pred_region
          %238 = dma.done %s231, 128
        $region44: #{tpu_custom_call.1} parent=39 // pred_fallthru
          _
        // Predicated region
        $region45: #{tpu_custom_call.1} parent=39 // pred_check
          %p239 = pneg %p65
        $region46: #{tpu_custom_call.1} parent=39 // pred_check_branch
          %241 = sbr.rel (%p239) target = $region48
        $region47: #{tpu_custom_call.1} parent=39 // pred_region
          %242 = dma.done [#allocation6], 512
        $region48: #{tpu_custom_call.1} parent=39 // pred_fallthru
          _
        // Predicated region
        $region49: #{tpu_custom_call.1} parent=39 // pred_check
          %p243 = pneg %p107
        $region50: #{tpu_custom_call.1} parent=39 // pred_check_branch
          %245 = sbr.rel (%p243) target = $region52
        $region51: #{tpu_custom_call.1} parent=39 // pred_region
          %246 = dma.done [#allocation6], 256
        $region52: #{tpu_custom_call.1} parent=39 // pred_fallthru
          _
        %s247 = sand.u32 %s31, 1
        %s248 = scalar_lea.sflag [#allocation3], %s247
        %s249 = sand.u32 %s31, 1
        %s250 = smul.addr %s249, 8
        %s251 = scalar_lea.vmem [#allocation2], %s250
        %p252 = pneg %p44
        %p253 = pneg %p41
        %p254 = pneg %p65
        %p255 = pneg %p62
        %p256 = pneg %p86
        %p257 = pneg %p83
        %p258 = pneg %p107
        %p259 = pneg %p104
        %p260 = pneg %p128
        %p261 = pneg %p125
        %p262 = pneg %p154
        %p263 = pneg %p151
        %s264 = sand.u32 %s141, 1
        %s265 = scalar_lea.sflag [#allocation4], %s264
        %s266 = sand.u32 %s141, 1
        %s267 = smul.addr %s266, 8
        %s268 = scalar_lea.vmem [#allocation8], %s267
        %v269 = vld [vmem:[%s234] sm:$0xff]
        %v270 = vld [vmem:[#allocation5] sm:$0xff]
        %v271 = vld [vmem:[#allocation5 + $0x8] sm:$0xff]
        %v272 = vld [vmem:[#allocation5 + $0x10] sm:$0xff]
        %v273 = vld [vmem:[#allocation5 + $0x18] sm:$0xff]
        %v274 = vld [vmem:[%s2] sm:$0x1]
        %v276 = vlaneseq
        %v277 = vshrl.u32 %v276, 7
        %v278 = vsub.s32 0, %v277
        %v279 = vrot.slane %v274, %v278
        %vm281 = vcmask 261120
        %v283 = vsel %vm281, %v269, 0
        %285 = vmatprep.subr.mxu0 0.0
        %286 = vmatpush1.msra.mxu0 0.0
        %287 = vmatprep.subr.mxu0 0.0
        %288 = vmatpush1.msra.mxu0 0.0
        %289 = vmatprep.subr.mxu0 0.0
        %290 = vmatpush1.msra.mxu0 0.0
        %291 = vmatprep.subr.mxu0 0.0
        %292 = vmatpush1.msra.mxu0 0.0
        %293 = vmatprep.subr.mxu0 0.0
        %294 = vmatpush1.msra.mxu0 0.0
        %295 = vmatprep.subr.mxu0 0.0
        %296 = vmatpush1.msra.mxu0 0.0
        %297 = vmatprep.subr.mxu0 0.0
        %298 = vmatpush1.msra.mxu0 0.0
        %299 = vmatprep.subr.mxu0 0.0
        %300 = vmatpush1.msra.mxu0 0.0
        %301 = vmatprep.subr.mxu0 0.0
        %302 = vmatpush1.msra.mxu0 0.0
        %303 = vmatprep.subr.mxu0 0.0
        %304 = vmatpush1.msra.mxu0 0.0
        %305 = vmatprep.subr.mxu0 0.0
        %306 = vmatpush1.msra.mxu0 0.0
        %307 = vmatprep.subr.mxu0 0.0
        %308 = vmatpush1.msra.mxu0 0.0
        %309 = vmatprep.subr.mxu0 0.0
        %310 = vmatpush1.msra.mxu0 %v273
        %311 = vmatprep.subr.mxu0 0.0
        %312 = vmatpush1.msra.mxu0 %v272
        %313 = vmatprep.subr.mxu0 0.0
        %314 = vmatpush1.msra.mxu0 %v271
        %315 = vmatprep.subr.mxu0 0.0
        %316 = vmatpush1.msra.mxu0 %v270
        %317 = vmatprep.subr.mxu0 0.0
        %318 = vmatpush2.msra.mxu0 0.0
        %319 = vmatprep.subr.mxu0 0.0
        %320 = vmatpush2.msra.mxu0 0.0
        %321 = vmatprep.subr.mxu0 0.0
        %322 = vmatpush2.msra.mxu0 0.0
        %323 = vmatprep.subr.mxu0 0.0
        %324 = vmatpush2.msra.mxu0 0.0
        %325 = vmatprep.subr.mxu0 0.0
        %326 = vmatpush2.msra.mxu0 0.0
        %327 = vmatprep.subr.mxu0 0.0
        %328 = vmatpush2.msra.mxu0 0.0
        %329 = vmatprep.subr.mxu0 0.0
        %330 = vmatpush2.msra.mxu0 0.0
        %331 = vmatprep.subr.mxu0 0.0
        %332 = vmatpush2.msra.mxu0 0.0
        %333 = vmatprep.subr.mxu0 0.0
        %334 = vmatpush2.msra.mxu0 0.0
        %335 = vmatprep.subr.mxu0 0.0
        %336 = vmatpush2.msra.mxu0 0.0
        %337 = vmatprep.subr.mxu0 0.0
        %338 = vmatpush2.msra.mxu0 0.0
        %339 = vmatprep.subr.mxu0 0.0
        %340 = vmatpush2.msra.mxu0 0.0
        %341 = vmatprep.subr.mxu0 0.0
        %342 = vmatpush2.msra.mxu0 0.0
        %343 = vmatprep.subr.mxu0 0.0
        %344 = vmatpush2.msra.mxu0 0.0
        %345 = vmatprep.subr.mxu0 0.0
        %346 = vmatpush2.msra.mxu0 0.0
        %347 = vmatprep.subr.mxu0 0.0
        %348 = vmatpush2.msra.mxu0 0.0
        %349 = vmatprep.mubr.f32.mxu0 0.0
        %350 = vmatmul.mubr.f32.gmra.mxu0 %v283
        %v351 = vpop.f32.mrf.mxu0
        %v352 = vadd.f32 %v279, %v351
        %v353 = vpop.f32.mrf.mxu0
        %354 = vdwg.mxu0
        %356 = vrot.lane.b32.xlu0 %v352, 112
        %v357 = vpop.permute.xlu0 %356
        %vm358 = vcmask 64512
        %v359 = vsel %vm358, %v352, 0
        %v361 = vsel %vm358, %v357, 0
        %363 = vmatprep.subr.mxu0 0.0
        %364 = vmatpush1.xpose.msra.mxu0 0.0
        %365 = vmatprep.subr.mxu0 0.0
        %366 = vmatpush1.xpose.msra.mxu0 0.0
        %367 = vmatprep.subr.mxu0 0.0
        %368 = vmatpush1.xpose.msra.mxu0 0.0
        %369 = vmatprep.subr.mxu0 0.0
        %370 = vmatpush1.xpose.msra.mxu0 0.0
        %371 = vmatprep.subr.mxu0 0.0
        %372 = vmatpush1.xpose.msra.mxu0 0.0
        %373 = vmatprep.subr.mxu0 0.0
        %374 = vmatpush1.xpose.msra.mxu0 0.0
        %375 = vmatprep.subr.mxu0 0.0
        %376 = vmatpush1.xpose.msra.mxu0 0.0
        %377 = vmatprep.subr.mxu0 0.0
        %378 = vmatpush1.xpose.msra.mxu0 0.0
        %379 = vmatprep.subr.mxu0 0.0
        %380 = vmatpush1.xpose.msra.mxu0 0.0
        %381 = vmatprep.subr.mxu0 0.0
        %382 = vmatpush1.xpose.msra.mxu0 0.0
        %383 = vmatprep.subr.mxu0 0.0
        %384 = vmatpush1.xpose.msra.mxu0 0.0
        %385 = vmatprep.subr.mxu0 0.0
        %386 = vmatpush1.xpose.msra.mxu0 0.0
        %387 = vmatprep.subr.mxu0 0.0
        %388 = vmatpush1.xpose.msra.mxu0 0.0
        %389 = vmatprep.subr.mxu0 0.0
        %390 = vmatpush1.xpose.msra.mxu0 0.0
        %391 = vmatprep.subr.mxu0 0.0
        %392 = vmatpush1.xpose.msra.mxu0 0.0
        %393 = vmatprep.subr.mxu0 0.0
        %394 = vmatpush1.xpose.msra.mxu0 %v361
        %395 = vmatprep.subr.mxu0 0.0
        %396 = vmatpush2.xpose.msra.mxu0 0.0
        %397 = vmatprep.subr.mxu0 0.0
        %398 = vmatpush2.xpose.msra.mxu0 0.0
        %399 = vmatprep.subr.mxu0 0.0
        %400 = vmatpush2.xpose.msra.mxu0 0.0
        %401 = vmatprep.subr.mxu0 0.0
        %402 = vmatpush2.xpose.msra.mxu0 0.0
        %403 = vmatprep.subr.mxu0 0.0
        %404 = vmatpush2.xpose.msra.mxu0 0.0
        %405 = vmatprep.subr.mxu0 0.0
        %406 = vmatpush2.xpose.msra.mxu0 0.0
        %407 = vmatprep.subr.mxu0 0.0
        %408 = vmatpush2.xpose.msra.mxu0 0.0
        %409 = vmatprep.subr.mxu0 0.0
        %410 = vmatpush2.xpose.msra.mxu0 0.0
        %411 = vmatprep.subr.mxu0 0.0
        %412 = vmatpush2.xpose.msra.mxu0 0.0
        %413 = vmatprep.subr.mxu0 0.0
        %414 = vmatpush2.xpose.msra.mxu0 0.0
        %415 = vmatprep.subr.mxu0 0.0
        %416 = vmatpush2.xpose.msra.mxu0 0.0
        %417 = vmatprep.subr.mxu0 0.0
        %418 = vmatpush2.xpose.msra.mxu0 0.0
        %419 = vmatprep.subr.mxu0 0.0
        %420 = vmatpush2.xpose.msra.mxu0 0.0
        %421 = vmatprep.subr.mxu0 0.0
        %422 = vmatpush2.xpose.msra.mxu0 0.0
        %423 = vmatprep.subr.mxu0 0.0
        %424 = vmatpush2.xpose.msra.mxu0 0.0
        %425 = vmatprep.subr.mxu0 0.0
        %426 = vmatpush2.xpose.msra.mxu0 0.0
        %427 = vmatprep.mubr.f32.mxu0 0.0
        %428 = vmatmul.mubr.f32.gmra.mxu0 %v359
        %v429 = vpop.f32.mrf.mxu0
        %v430 = vadd.f32 0.0, %v429
        %v431 = vpop.f32.mrf.mxu0
        %432 = vdwg.mxu0
        %v433 = vsel %vm358, %v430, -inf
        %434 = vmax.xlane.f32.xlu0 %v433
        %v435 = vpop.xlane.xlu0 %434
        %v436 = vsub.f32 %v430, %v435
        %v437 = vmul.f32 %v436, 1.442695
        %v438 = vpow.pop %v437
        %v439 = vsel %vm358, %v438, 0.0
        %440 = vadd.xlane.f32.xlu0 %v439
        %v441 = vpop.xlane.xlu0 %440
        %v442 = vrcp.pop %v441
        %v443 = vmul.f32 %v438, %v442
        %444 = vrot.lane.b32.xlu0 %v352, 96
        %v445 = vpop.permute.xlu0 %444
        %v448 = vsel %vm358, %v443, 0
        %450 = vmatprep.subr.mxu0 0.0
        %451 = vmatpush1.msra.mxu0 0.0
        %452 = vmatprep.subr.mxu0 0.0
        %453 = vmatpush1.msra.mxu0 0.0
        %454 = vmatprep.subr.mxu0 0.0
        %455 = vmatpush1.msra.mxu0 0.0
        %456 = vmatprep.subr.mxu0 0.0
        %457 = vmatpush1.msra.mxu0 0.0
        %458 = vmatprep.subr.mxu0 0.0
        %459 = vmatpush1.msra.mxu0 0.0
        %460 = vmatprep.subr.mxu0 0.0
        %461 = vmatpush1.msra.mxu0 0.0
        %462 = vmatprep.subr.mxu0 0.0
        %463 = vmatpush1.msra.mxu0 0.0
        %464 = vmatprep.subr.mxu0 0.0
        %465 = vmatpush1.msra.mxu0 0.0
        %466 = vmatprep.subr.mxu0 0.0
        %467 = vmatpush1.msra.mxu0 0.0
        %468 = vmatprep.subr.mxu0 0.0
        %469 = vmatpush1.msra.mxu0 0.0
        %470 = vmatprep.subr.mxu0 0.0
        %471 = vmatpush1.msra.mxu0 0.0
        %472 = vmatprep.subr.mxu0 0.0
        %473 = vmatpush1.msra.mxu0 0.0
        %474 = vmatprep.subr.mxu0 0.0
        %475 = vmatpush1.msra.mxu0 0.0
        %476 = vmatprep.subr.mxu0 0.0
        %477 = vmatpush1.msra.mxu0 0.0
        %478 = vmatprep.subr.mxu0 0.0
        %479 = vmatpush1.msra.mxu0 0.0
        %480 = vmatprep.subr.mxu0 0.0
        %481 = vmatpush1.msra.mxu0 %v445
        %482 = vmatprep.subr.mxu0 0.0
        %483 = vmatpush2.msra.mxu0 0.0
        %484 = vmatprep.subr.mxu0 0.0
        %485 = vmatpush2.msra.mxu0 0.0
        %486 = vmatprep.subr.mxu0 0.0
        %487 = vmatpush2.msra.mxu0 0.0
        %488 = vmatprep.subr.mxu0 0.0
        %489 = vmatpush2.msra.mxu0 0.0
        %490 = vmatprep.subr.mxu0 0.0
        %491 = vmatpush2.msra.mxu0 0.0
        %492 = vmatprep.subr.mxu0 0.0
        %493 = vmatpush2.msra.mxu0 0.0
        %494 = vmatprep.subr.mxu0 0.0
        %495 = vmatpush2.msra.mxu0 0.0
        %496 = vmatprep.subr.mxu0 0.0
        %497 = vmatpush2.msra.mxu0 0.0
        %498 = vmatprep.subr.mxu0 0.0
        %499 = vmatpush2.msra.mxu0 0.0
        %500 = vmatprep.subr.mxu0 0.0
        %501 = vmatpush2.msra.mxu0 0.0
        %502 = vmatprep.subr.mxu0 0.0
        %503 = vmatpush2.msra.mxu0 0.0
        %504 = vmatprep.subr.mxu0 0.0
        %505 = vmatpush2.msra.mxu0 0.0
        %506 = vmatprep.subr.mxu0 0.0
        %507 = vmatpush2.msra.mxu0 0.0
        %508 = vmatprep.subr.mxu0 0.0
        %509 = vmatpush2.msra.mxu0 0.0
        %510 = vmatprep.subr.mxu0 0.0
        %511 = vmatpush2.msra.mxu0 0.0
        %512 = vmatprep.subr.mxu0 0.0
        %513 = vmatpush2.msra.mxu0 0.0
        %514 = vmatprep.mubr.f32.mxu0 0.0
        %515 = vmatmul.mubr.f32.gmra.mxu0 %v448
        %v516 = vpop.f32.mrf.mxu0
        %v517 = vadd.f32 0.0, %v516
        %v518 = vpop.f32.mrf.mxu0
        %519 = vdwg.mxu0
        %v520 = vld [vmem:[#allocation7] sm:$0xff]
        %521 = vrot.lane.b32.xlu0 %v352, 120
        %v522 = vpop.permute.xlu0 %521
        %523 = vrot.lane.b32.xlu0 %v352, 104
        %v524 = vpop.permute.xlu0 %523
        %v525 = vsel %vm358, %v522, 0
        %v527 = vsel %vm358, %v524, 0
        %529 = vmatprep.subr.mxu0 0.0
        %530 = vmatpush1.xpose.msra.mxu0 0.0
        %531 = vmatprep.subr.mxu0 0.0
        %532 = vmatpush1.xpose.msra.mxu0 0.0
        %533 = vmatprep.subr.mxu0 0.0
        %534 = vmatpush1.xpose.msra.mxu0 0.0
        %535 = vmatprep.subr.mxu0 0.0
        %536 = vmatpush1.xpose.msra.mxu0 0.0
        %537 = vmatprep.subr.mxu0 0.0
        %538 = vmatpush1.xpose.msra.mxu0 0.0
        %539 = vmatprep.subr.mxu0 0.0
        %540 = vmatpush1.xpose.msra.mxu0 0.0
        %541 = vmatprep.subr.mxu0 0.0
        %542 = vmatpush1.xpose.msra.mxu0 0.0
        %543 = vmatprep.subr.mxu0 0.0
        %544 = vmatpush1.xpose.msra.mxu0 0.0
        %545 = vmatprep.subr.mxu0 0.0
        %546 = vmatpush1.xpose.msra.mxu0 0.0
        %547 = vmatprep.subr.mxu0 0.0
        %548 = vmatpush1.xpose.msra.mxu0 0.0
        %549 = vmatprep.subr.mxu0 0.0
        %550 = vmatpush1.xpose.msra.mxu0 0.0
        %551 = vmatprep.subr.mxu0 0.0
        %552 = vmatpush1.xpose.msra.mxu0 0.0
        %553 = vmatprep.subr.mxu0 0.0
        %554 = vmatpush1.xpose.msra.mxu0 0.0
        %555 = vmatprep.subr.mxu0 0.0
        %556 = vmatpush1.xpose.msra.mxu0 0.0
        %557 = vmatprep.subr.mxu0 0.0
        %558 = vmatpush1.xpose.msra.mxu0 0.0
        %559 = vmatprep.subr.mxu0 0.0
        %560 = vmatpush1.xpose.msra.mxu0 %v527
        %561 = vmatprep.subr.mxu0 0.0
        %562 = vmatpush2.xpose.msra.mxu0 0.0
        %563 = vmatprep.subr.mxu0 0.0
        %564 = vmatpush2.xpose.msra.mxu0 0.0
        %565 = vmatprep.subr.mxu0 0.0
        %566 = vmatpush2.xpose.msra.mxu0 0.0
        %567 = vmatprep.subr.mxu0 0.0
        %568 = vmatpush2.xpose.msra.mxu0 0.0
        %569 = vmatprep.subr.mxu0 0.0
        %570 = vmatpush2.xpose.msra.mxu0 0.0
        %571 = vmatprep.subr.mxu0 0.0
        %572 = vmatpush2.xpose.msra.mxu0 0.0
        %573 = vmatprep.subr.mxu0 0.0
        %574 = vmatpush2.xpose.msra.mxu0 0.0
        %575 = vmatprep.subr.mxu0 0.0
        %576 = vmatpush2.xpose.msra.mxu0 0.0
        %577 = vmatprep.subr.mxu0 0.0
        %578 = vmatpush2.xpose.msra.mxu0 0.0
        %579 = vmatprep.subr.mxu0 0.0
        %580 = vmatpush2.xpose.msra.mxu0 0.0
        %581 = vmatprep.subr.mxu0 0.0
        %582 = vmatpush2.xpose.msra.mxu0 0.0
        %583 = vmatprep.subr.mxu0 0.0
        %584 = vmatpush2.xpose.msra.mxu0 0.0
        %585 = vmatprep.subr.mxu0 0.0
        %586 = vmatpush2.xpose.msra.mxu0 0.0
        %587 = vmatprep.subr.mxu0 0.0
        %588 = vmatpush2.xpose.msra.mxu0 0.0
        %589 = vmatprep.subr.mxu0 0.0
        %590 = vmatpush2.xpose.msra.mxu0 0.0
        %591 = vmatprep.subr.mxu0 0.0
        %592 = vmatpush2.xpose.msra.mxu0 0.0
        %593 = vmatprep.mubr.f32.mxu0 0.0
        %594 = vmatmul.mubr.f32.gmra.mxu0 %v525
        %v595 = vpop.f32.mrf.mxu0
        %v596 = vadd.f32 0.0, %v595
        %v597 = vpop.f32.mrf.mxu0
        %598 = vdwg.mxu0
        %v599 = vsel %vm358, %v596, -inf
        %600 = vmax.xlane.f32.xlu0 %v599
        %v601 = vpop.xlane.xlu0 %600
        %v602 = vsub.f32 %v596, %v601
        %v603 = vmul.f32 %v602, 1.442695
        %v604 = vpow.pop %v603
        %v605 = vsel %vm358, %v604, 0.0
        %606 = vadd.xlane.f32.xlu0 %v605
        %v607 = vpop.xlane.xlu0 %606
        %v608 = vrcp.pop %v607
        %v609 = vmul.f32 %v604, %v608
        %610 = vrot.lane.b32.xlu0 %v352, 88
        %v611 = vpop.permute.xlu0 %610
        %v614 = vsel %vm358, %v609, 0
        %616 = vmatprep.subr.mxu0 0.0
        %617 = vmatpush1.msra.mxu0 0.0
        %618 = vmatprep.subr.mxu0 0.0
        %619 = vmatpush1.msra.mxu0 0.0
        %620 = vmatprep.subr.mxu0 0.0
        %621 = vmatpush1.msra.mxu0 0.0
        %622 = vmatprep.subr.mxu0 0.0
        %623 = vmatpush1.msra.mxu0 0.0
        %624 = vmatprep.subr.mxu0 0.0
        %625 = vmatpush1.msra.mxu0 0.0
        %626 = vmatprep.subr.mxu0 0.0
        %627 = vmatpush1.msra.mxu0 0.0
        %628 = vmatprep.subr.mxu0 0.0
        %629 = vmatpush1.msra.mxu0 0.0
        %630 = vmatprep.subr.mxu0 0.0
        %631 = vmatpush1.msra.mxu0 0.0
        %632 = vmatprep.subr.mxu0 0.0
        %633 = vmatpush1.msra.mxu0 0.0
        %634 = vmatprep.subr.mxu0 0.0
        %635 = vmatpush1.msra.mxu0 0.0
        %636 = vmatprep.subr.mxu0 0.0
        %637 = vmatpush1.msra.mxu0 0.0
        %638 = vmatprep.subr.mxu0 0.0
        %639 = vmatpush1.msra.mxu0 0.0
        %640 = vmatprep.subr.mxu0 0.0
        %641 = vmatpush1.msra.mxu0 0.0
        %642 = vmatprep.subr.mxu0 0.0
        %643 = vmatpush1.msra.mxu0 0.0
        %644 = vmatprep.subr.mxu0 0.0
        %645 = vmatpush1.msra.mxu0 0.0
        %646 = vmatprep.subr.mxu0 0.0
        %647 = vmatpush1.msra.mxu0 %v611
        %648 = vmatprep.subr.mxu0 0.0
        %649 = vmatpush2.msra.mxu0 0.0
        %650 = vmatprep.subr.mxu0 0.0
        %651 = vmatpush2.msra.mxu0 0.0
        %652 = vmatprep.subr.mxu0 0.0
        %653 = vmatpush2.msra.mxu0 0.0
        %654 = vmatprep.subr.mxu0 0.0
        %655 = vmatpush2.msra.mxu0 0.0
        %656 = vmatprep.subr.mxu0 0.0
        %657 = vmatpush2.msra.mxu0 0.0
        %658 = vmatprep.subr.mxu0 0.0
        %659 = vmatpush2.msra.mxu0 0.0
        %660 = vmatprep.subr.mxu0 0.0
        %661 = vmatpush2.msra.mxu0 0.0
        %662 = vmatprep.subr.mxu0 0.0
        %663 = vmatpush2.msra.mxu0 0.0
        %664 = vmatprep.subr.mxu0 0.0
        %665 = vmatpush2.msra.mxu0 0.0
        %666 = vmatprep.subr.mxu0 0.0
        %667 = vmatpush2.msra.mxu0 0.0
        %668 = vmatprep.subr.mxu0 0.0
        %669 = vmatpush2.msra.mxu0 0.0
        %670 = vmatprep.subr.mxu0 0.0
        %671 = vmatpush2.msra.mxu0 0.0
        %672 = vmatprep.subr.mxu0 0.0
        %673 = vmatpush2.msra.mxu0 0.0
        %674 = vmatprep.subr.mxu0 0.0
        %675 = vmatpush2.msra.mxu0 0.0
        %676 = vmatprep.subr.mxu0 0.0
        %677 = vmatpush2.msra.mxu0 0.0
        %678 = vmatprep.subr.mxu0 0.0
        %679 = vmatpush2.msra.mxu0 0.0
        %680 = vmatprep.mubr.f32.mxu0 0.0
        %681 = vmatmul.mubr.f32.gmra.mxu0 %v614
        %v682 = vpop.f32.mrf.mxu0
        %v683 = vadd.f32 0.0, %v682
        %v684 = vpop.f32.mrf.mxu0
        %685 = vdwg.mxu0
        %v686 = vld [vmem:[#allocation7 + $0x8] sm:$0xff]
        %v688 = vsel %vm358, %v683, 0
        %690 = vmatprep.subr.mxu0 0.0
        %691 = vmatpush1.msra.mxu0 0.0
        %692 = vmatprep.subr.mxu0 0.0
        %693 = vmatpush1.msra.mxu0 0.0
        %694 = vmatprep.subr.mxu0 0.0
        %695 = vmatpush1.msra.mxu0 0.0
        %696 = vmatprep.subr.mxu0 0.0
        %697 = vmatpush1.msra.mxu0 0.0
        %698 = vmatprep.subr.mxu0 0.0
        %699 = vmatpush1.msra.mxu0 0.0
        %700 = vmatprep.subr.mxu0 0.0
        %701 = vmatpush1.msra.mxu0 0.0
        %702 = vmatprep.subr.mxu0 0.0
        %703 = vmatpush1.msra.mxu0 0.0
        %704 = vmatprep.subr.mxu0 0.0
        %705 = vmatpush1.msra.mxu0 0.0
        %706 = vmatprep.subr.mxu0 0.0
        %707 = vmatpush1.msra.mxu0 0.0
        %708 = vmatprep.subr.mxu0 0.0
        %709 = vmatpush1.msra.mxu0 0.0
        %710 = vmatprep.subr.mxu0 0.0
        %711 = vmatpush1.msra.mxu0 0.0
        %712 = vmatprep.subr.mxu0 0.0
        %713 = vmatpush1.msra.mxu0 0.0
        %714 = vmatprep.subr.mxu0 0.0
        %715 = vmatpush1.msra.mxu0 0.0
        %716 = vmatprep.subr.mxu0 0.0
        %717 = vmatpush1.msra.mxu0 0.0
        %718 = vmatprep.subr.mxu0 0.0
        %719 = vmatpush1.msra.mxu0 0.0
        %720 = vmatprep.subr.mxu0 0.0
        %721 = vmatpush1.msra.mxu0 %v686
        %722 = vmatprep.subr.mxu0 0.0
        %723 = vmatpush2.msra.mxu0 0.0
        %724 = vmatprep.subr.mxu0 0.0
        %725 = vmatpush2.msra.mxu0 0.0
        %726 = vmatprep.subr.mxu0 0.0
        %727 = vmatpush2.msra.mxu0 0.0
        %728 = vmatprep.subr.mxu0 0.0
        %729 = vmatpush2.msra.mxu0 0.0
        %730 = vmatprep.subr.mxu0 0.0
        %731 = vmatpush2.msra.mxu0 0.0
        %732 = vmatprep.subr.mxu0 0.0
        %733 = vmatpush2.msra.mxu0 0.0
        %734 = vmatprep.subr.mxu0 0.0
        %735 = vmatpush2.msra.mxu0 0.0
        %736 = vmatprep.subr.mxu0 0.0
        %737 = vmatpush2.msra.mxu0 0.0
        %738 = vmatprep.subr.mxu0 0.0
        %739 = vmatpush2.msra.mxu0 0.0
        %740 = vmatprep.subr.mxu0 0.0
        %741 = vmatpush2.msra.mxu0 0.0
        %742 = vmatprep.subr.mxu0 0.0
        %743 = vmatpush2.msra.mxu0 0.0
        %744 = vmatprep.subr.mxu0 0.0
        %745 = vmatpush2.msra.mxu0 0.0
        %746 = vmatprep.subr.mxu0 0.0
        %747 = vmatpush2.msra.mxu0 0.0
        %748 = vmatprep.subr.mxu0 0.0
        %749 = vmatpush2.msra.mxu0 0.0
        %750 = vmatprep.subr.mxu0 0.0
        %751 = vmatpush2.msra.mxu0 0.0
        %752 = vmatprep.subr.mxu0 0.0
        %753 = vmatpush2.msra.mxu0 0.0
        %754 = vmatprep.mubr.f32.mxu0 0.0
        %755 = vmatmul.mubr.f32.gmra.mxu0 %v688
        %v756 = vpop.f32.mrf.mxu0
        %v757 = vadd.f32 0.0, %v756
        %v758 = vpop.f32.mrf.mxu0
        %759 = vdwg.mxu0
        %v761 = vsel %vm358, %v517, 0
        %763 = vmatprep.subr.mxu0 0.0
        %764 = vmatpush1.msra.mxu0 0.0
        %765 = vmatprep.subr.mxu0 0.0
        %766 = vmatpush1.msra.mxu0 0.0
        %767 = vmatprep.subr.mxu0 0.0
        %768 = vmatpush1.msra.mxu0 0.0
        %769 = vmatprep.subr.mxu0 0.0
        %770 = vmatpush1.msra.mxu0 0.0
        %771 = vmatprep.subr.mxu0 0.0
        %772 = vmatpush1.msra.mxu0 0.0
        %773 = vmatprep.subr.mxu0 0.0
        %774 = vmatpush1.msra.mxu0 0.0
        %775 = vmatprep.subr.mxu0 0.0
        %776 = vmatpush1.msra.mxu0 0.0
        %777 = vmatprep.subr.mxu0 0.0
        %778 = vmatpush1.msra.mxu0 0.0
        %779 = vmatprep.subr.mxu0 0.0
        %780 = vmatpush1.msra.mxu0 0.0
        %781 = vmatprep.subr.mxu0 0.0
        %782 = vmatpush1.msra.mxu0 0.0
        %783 = vmatprep.subr.mxu0 0.0
        %784 = vmatpush1.msra.mxu0 0.0
        %785 = vmatprep.subr.mxu0 0.0
        %786 = vmatpush1.msra.mxu0 0.0
        %787 = vmatprep.subr.mxu0 0.0
        %788 = vmatpush1.msra.mxu0 0.0
        %789 = vmatprep.subr.mxu0 0.0
        %790 = vmatpush1.msra.mxu0 0.0
        %791 = vmatprep.subr.mxu0 0.0
        %792 = vmatpush1.msra.mxu0 0.0
        %793 = vmatprep.subr.mxu0 0.0
        %794 = vmatpush1.msra.mxu0 %v520
        %795 = vmatprep.subr.mxu0 0.0
        %796 = vmatpush2.msra.mxu0 0.0
        %797 = vmatprep.subr.mxu0 0.0
        %798 = vmatpush2.msra.mxu0 0.0
        %799 = vmatprep.subr.mxu0 0.0
        %800 = vmatpush2.msra.mxu0 0.0
        %801 = vmatprep.subr.mxu0 0.0
        %802 = vmatpush2.msra.mxu0 0.0
        %803 = vmatprep.subr.mxu0 0.0
        %804 = vmatpush2.msra.mxu0 0.0
        %805 = vmatprep.subr.mxu0 0.0
        %806 = vmatpush2.msra.mxu0 0.0
        %807 = vmatprep.subr.mxu0 0.0
        %808 = vmatpush2.msra.mxu0 0.0
        %809 = vmatprep.subr.mxu0 0.0
        %810 = vmatpush2.msra.mxu0 0.0
        %811 = vmatprep.subr.mxu0 0.0
        %812 = vmatpush2.msra.mxu0 0.0
        %813 = vmatprep.subr.mxu0 0.0
        %814 = vmatpush2.msra.mxu0 0.0
        %815 = vmatprep.subr.mxu0 0.0
        %816 = vmatpush2.msra.mxu0 0.0
        %817 = vmatprep.subr.mxu0 0.0
        %818 = vmatpush2.msra.mxu0 0.0
        %819 = vmatprep.subr.mxu0 0.0
        %820 = vmatpush2.msra.mxu0 0.0
        %821 = vmatprep.subr.mxu0 0.0
        %822 = vmatpush2.msra.mxu0 0.0
        %823 = vmatprep.subr.mxu0 0.0
        %824 = vmatpush2.msra.mxu0 0.0
        %825 = vmatprep.subr.mxu0 0.0
        %826 = vmatpush2.msra.mxu0 0.0
        %827 = vmatprep.mubr.f32.mxu0 0.0
        %828 = vmatmul.mubr.f32.gmra.mxu0 %v761
        %v829 = vpop.f32.mrf.mxu0
        %v830 = vadd.f32 %v757, %v829
        %v831 = vpop.f32.mrf.mxu0
        %832 = vdwg.mxu0
        %v833 = vld [vmem:[%s4] sm:$0x1]
        %v835 = vlaneseq
        %v836 = vshrl.u32 %v835, 7
        %v837 = vsub.s32 0, %v836
        %v838 = vrot.slane %v833, %v837
        %v840 = vadd.f32 %v830, %v838
        %v841 = vadd.f32 %v840, %v269
        %842 = vst.msk [vmem:[%s268] sm:$0xff] %vm281, %v841
        %s843 = sand.u32 %s141, 1
        %s844 = scalar_lea.sflag [#allocation4], %s843
        %s845 = sand.u32 %s141, 1
        %s846 = smul.addr %s845, 8
        %s847 = scalar_lea.vmem [#allocation8], %s846
        // Predicated region
        $region53: #{tpu_custom_call.1} parent=39 // pred_check
          %p848 = pneg %p151
        $region54: #{tpu_custom_call.1} parent=39 // pred_check_branch
          %850 = sbr.rel (%p848) target = $region56
        $region55: #{tpu_custom_call.1} parent=39 // pred_region
          %s852 = ssub.s32 128, 128
          %853 = vsyncadd %s844, %s852
          %s854 = smul.addr %s23, 128
          %s855 = scalar_lea.hbm %s5, %s854
          %s857 = sshll.u32 %s847, 4
          %s858 = int_to_ptr.vmem [resolvable:$true] %s857
          %860 = dma.vmem_to_hbm [thread:$0]  %s858, 128, %s855, %s844
        $region56: #{tpu_custom_call.1} parent=39 // pred_fallthru
          _
      $region40: #{tpu_custom_call.1} parent=5 // pred_fallthru
        _
      %p861 = scmp.le.s32.totalorder 2, %s18
      // Predicated region
      $region57: #{tpu_custom_call.1} parent=5 // pred_check
        %p862 = pneg %p861
      $region58: #{tpu_custom_call.1} parent=5 // pred_check_branch
        %864 = sbr.rel (%p862) target = $region60
      $region59: #{tpu_custom_call.1} parent=5 // pred_region
        %s865 = ssub.s32 %s18, 2
        // Predicated region
        $region61: #{tpu_custom_call.1} parent=59 // pred_check
          %p866 = pneg %p157
        $region62: #{tpu_custom_call.1} parent=59 // pred_check_branch
          %868 = sbr.rel (%p866) target = $region64
        $region63: #{tpu_custom_call.1} parent=59 // pred_region
          %s869 = sand.u32 %s142, 1
          %s870 = scalar_lea.sflag [#allocation4], %s869
          %s871 = sand.u32 %s142, 1
          %s872 = smul.addr %s871, 8
          %s873 = scalar_lea.vmem [#allocation8], %s872
          %874 = dma.done %s870, 128
        $region64: #{tpu_custom_call.1} parent=59 // pred_fallthru
          _
      $region60: #{tpu_custom_call.1} parent=5 // pred_fallthru
        _
    $region6: #{tpu_custom_call.1} parent=1 // loop_footer
      %s22 = sadd.s32 1, %s18
    $region7: #{tpu_custom_call.1} parent=1 // loop_footer_branch
      %17 = sbr.rel target = $region3
    $region8: #{tpu_custom_call.1} parent=1 // loop_exit
      _
    %875 = vsyncpa [#allocation3], 1
    %s876 = scalar_lea.sflag [#allocation3], 1
    %877 = vsyncpa %s876, 1
    %878 = vsyncpa [#allocation6], 1
    %879 = vsyncpa [#allocation4], 1
    %s880 = scalar_lea.sflag [#allocation4], 1
    %881 = vsyncpa %s880, 1

</llo_original>
